<compile_context>
chip_gen: v6e
topology: v6e:2x2x1
jax: 0.10.0
libtpu: 0.0.40
codegen_flags: <defaults>
</compile_context>

<pallas_src>
import functools
from collections import namedtuple

import jax
import jax.numpy as jnp
from jax.experimental import pallas as pl
from jax.experimental.pallas import tpu as pltpu


def _round_up(n, m):
    return ((n + m - 1) // m) * m


def _cdiv(a, b):
    return (a + b - 1) // b


PackedMLP = namedtuple(
    "PackedMLP",
    ["w", "b", "row_starts", "row_sizes", "in_dim", "in_dim_p", "out_dim", "width"],
)


# ---------------------------------------------------------------------------
# Parameter packing: (w1,b1,w2,b2,w3,b3) -> one weight slab + one bias slab.
#   * columns padded to width = round_up(max dout, 128) for every layer
#   * rows padded to 16-aligned K for layer 0, full `width` K for later layers
#   * bias kept in f32 for accuracy
# ---------------------------------------------------------------------------
def pack_params(params, w_dtype=jnp.bfloat16):
    ws = [params[0], params[2], params[4]]
    bs = [params[1], params[3], params[5]]
    PACK = 16  # bf16 sublane packing factor; over-aligned (and fine) for f32
    width = _round_up(max(w.shape[1] for w in ws), 128)

    row_starts, row_sizes, blocks = [], [], []
    r0 = 0
    for li, w in enumerate(ws):
        din, dout = w.shape
        assert dout <= width
        if li == 0:
            din_p = _round_up(din, PACK)
        else:
            assert din <= width, "hidden dim wider than packed activation width"
            din_p = width  # consumes the full-width activation of the prev layer
        blk = jnp.zeros((din_p, width), dtype=w_dtype)
        blk = blk.at[:din, :dout].set(jnp.asarray(w, dtype=w_dtype))
        blocks.append(blk)
        row_starts.append(r0)
        row_sizes.append(din_p)
        r0 += din_p
    w_packed = jnp.concatenate(blocks, axis=0)

    b_packed = jnp.zeros((len(bs), width), dtype=jnp.float32)
    for i, b in enumerate(bs):
        vec = jnp.asarray(b, dtype=jnp.float32).reshape(-1)
        b_packed = b_packed.at[i, : vec.shape[0]].set(vec)

    return PackedMLP(
        w=w_packed,
        b=b_packed,
        row_starts=tuple(row_starts),
        row_sizes=tuple(row_sizes),
        in_dim=ws[0].shape[0],
        in_dim_p=row_sizes[0],
        out_dim=ws[-1].shape[1],
        width=width,
    )


# ---------------------------------------------------------------------------
# Kernel: one batch tile through the whole MLP, fused in VMEM.
# ---------------------------------------------------------------------------
def mlp2_kernel(x_ref, w_ref, b_ref, o_ref, *, row_starts, row_sizes):
    wdt = w_ref.dtype
    n_layers = len(row_starts)
    h = x_ref[...]                                   # (TB, in_dim_p), storage dtype
    for li in range(n_layers):
        r0, rs = row_starts[li], row_sizes[li]
        w = w_ref[r0:r0 + rs, :]                     # static, tile-aligned ref slice
        b = b_ref[li:li + 1, :]                      # (1, width), f32
        h = jnp.dot(h, w, preferred_element_type=jnp.float32) + b
        if li < n_layers - 1:
            # ReLU / bias in f32 (no bf16 VALU on v5e); narrow next MXU LHS.
            h = jnp.maximum(h, 0.0).astype(wdt)
    o_ref[...] = h.astype(o_ref.dtype)


# ---------------------------------------------------------------------------
# Wrapper: batch-tiled pallas_call with resident packed params.
# ---------------------------------------------------------------------------
def mlp2_forward(x, packed, *, tb=2048, min_steps=4, out_dtype=None):
    w_packed, b_packed = packed.w, packed.b
    storage_dtype = w_packed.dtype
    out_dtype = storage_dtype if out_dtype is None else out_dtype

    B, in_dim = x.shape
    assert in_dim == packed.in_dim, "x feature dim does not match packed params"

    # --- tile-size policy ---------------------------------------------------
    PACK = 16                      # multiple of 8 (f32 sublane) and 16 (bf16 pack)
    TB_CAP = 8192                  # VMEM-safe on v7x (64 MiB) with headroom
    tb = max(min(int(tb), TB_CAP), PACK)
    # Keep the grid at least `min_steps` long so v7x's 2 TensorCores both get
    # work and the input/output DMA pipeline stays overlapped.
    tb = min(tb, max(_cdiv(B, max(min_steps, 1)), PACK))
    tb = _round_up(tb, PACK)
    b_pad = _round_up(B, tb)

    # --- wrapper-side cast + padding -----------------------------------------
    x = x.astype(storage_dtype)
    pad_rows = b_pad - B
    pad_cols = packed.in_dim_p - in_dim
    if pad_rows or pad_cols:
        x = jnp.pad(x, ((0, pad_rows), (0, pad_cols)))

    grid = (b_pad // tb,)
    kernel = functools.partial(
        mlp2_kernel, row_starts=packed.row_starts, row_sizes=packed.row_sizes
    )
    out = pl.pallas_call(
        kernel,
        out_shape=jax.ShapeDtypeStruct((b_pad, packed.width), out_dtype),
        grid=grid,
        in_specs=[
            pl.BlockSpec((tb, packed.in_dim_p), lambda i: (i, 0)),   # batch-tiled x
            pl.BlockSpec(w_packed.shape, lambda i: (0, 0)),          # resident W slab
            pl.BlockSpec(b_packed.shape, lambda i: (0, 0)),          # resident bias
        ],
        out_specs=pl.BlockSpec((tb, packed.width), lambda i: (i, 0)),
        compiler_params=pltpu.CompilerParams(
            dimension_semantics=("parallel",),
            vmem_limit_bytes=48 * 1024 * 1024,
        ),
    )(x, w_packed, b_packed)

    return out[:B, : packed.out_dim]


# ---------------------------------------------------------------------------
# Reference init / forward (PyTorch nn.Linear-like semantics) for correctness.
# ---------------------------------------------------------------------------
def init_params(key, in_dim=16, h1=32, h2=64, out_dim=128, dtype=jnp.float32):
    ks = jax.random.split(key, 6)

    def lin(kw, kb, fan_in, fan_out):
        bound = 1.0 / (fan_in ** 0.5)
        w = jax.random.uniform(kw, (fan_in, fan_out), dtype, -bound, bound)
        b = jax.random.uniform(kb, (1, fan_out), dtype, -bound, bound)
        return w, b

    w1, b1 = lin(ks[0], ks[1], in_dim, h1)
    w2, b2 = lin(ks[2], ks[3], h1, h2)
    w3, b3 = lin(ks[4], ks[5], h2, out_dim)
    return (w1, b1, w2, b2, w3, b3)


def mlp2_ref(x, params):
    w1, b1, w2, b2, w3, b3 = params
    h = jnp.maximum(x @ w1 + b1, 0.0)
    h = jnp.maximum(h @ w2 + b2, 0.0)
    return h @ w3 + b3


if __name__ == "__main__":
    key = jax.random.PRNGKey(0)
    kx1, kx2, kp = jax.random.split(key, 3)

    in_dim, out_dim = 16, 128
    params = init_params(kp, in_dim=in_dim)

    # --- check 1: small, non-tile-multiple batch, f32 storage (tight tol) ---
    B1 = 200
    x1 = jax.random.normal(kx1, (B1, in_dim), dtype=jnp.float32)
    ref1 = mlp2_ref(x1, params)
    packed_f32 = pack_params(params, w_dtype=jnp.float32)
    out1 = jax.block_until_ready(
        mlp2_forward(x1, packed_f32, out_dtype=jnp.float32)
    )
    assert out1.shape == (B1, out_dim)
    assert out1.dtype == jnp.float32
    assert jnp.allclose(out1, ref1, atol=1e-5, rtol=1e-5)

    # --- check 2: larger batch, default bf16 storage/output, multi-step grid ---
    B2 = 4096
    x2 = jax.random.normal(kx2, (B2, in_dim), dtype=jnp.float32)
    ref2 = mlp2_ref(x2, params)
    packed_bf16 = pack_params(params)            # bf16 is the default storage
    out2 = jax.block_until_ready(mlp2_forward(x2, packed_bf16))
    assert out2.shape == (B2, out_dim)
    assert out2.dtype == jnp.bfloat16
    assert jnp.allclose(out2.astype(jnp.float32), ref2, atol=5e-2, rtol=5e-2)

    print("KERNEL_OK")
</pallas_src>

<mosaic_0001>
module attributes {stable_mosaic.version = 11 : i64} {
  func.func @mlp2_kernel(%arg0: i32, %arg1: memref<64x16xf32, #tpu.memory_space<vmem>>, %arg2: memref<272x128xf32, #tpu.memory_space<vmem>>, %arg3: memref<3x128xf32, #tpu.memory_space<vmem>>, %arg4: memref<64x128xf32, #tpu.memory_space<vmem>>) attributes {dimension_semantics = [#tpu.dimension_semantics<parallel>], iteration_bounds = array<i64: 4>, scalar_prefetch = 0 : i64, scratch_operands = 0 : i64, tpu.core_type = #tpu.core_type<tc>, window_params = [{transform_indices = @transform_0, window_bounds = array<i64: 64, 16>}, {pipeline_mode = #tpu.pipeline_mode<synchronous>, transform_indices = @transform_1, window_bounds = array<i64: 272, 128>}, {pipeline_mode = #tpu.pipeline_mode<synchronous>, transform_indices = @transform_2, window_bounds = array<i64: 3, 128>}, {transform_indices = @transform_3, window_bounds = array<i64: 64, 128>}]} {
    %c0 = arith.constant 0 : index
    %c0_0 = arith.constant 0 : index
    %0 = vector.load %arg1[%c0, %c0_0] : memref<64x16xf32, #tpu.memory_space<vmem>>, vector<64x16xf32>
    %c0_1 = arith.constant 0 : index
    %c0_2 = arith.constant 0 : index
    %1 = vector.load %arg2[%c0_1, %c0_2] : memref<272x128xf32, #tpu.memory_space<vmem>>, vector<16x128xf32>
    %c0_3 = arith.constant 0 : index
    %c0_4 = arith.constant 0 : index
    %2 = vector.load %arg3[%c0_3, %c0_4] : memref<3x128xf32, #tpu.memory_space<vmem>>, vector<1x128xf32>
    %cst = arith.constant dense<0.000000e+00> : vector<64x128xf32>
    %3 = tpu.matmul %0, %1, %cst {dimension_numbers = #tpu.dot_dimension_numbers<[1], [0], [0], [1], [0, 0, 1, 1], [], []>} : vector<64x16xf32>, vector<16x128xf32>, vector<64x128xf32> -> vector<64x128xf32>
    %4 = vector.broadcast %2 : vector<1x128xf32> to vector<64x128xf32>
    %5 = arith.addf %3, %4 : vector<64x128xf32>
    %cst_5 = arith.constant 0.000000e+00 : f32
    %6 = vector.broadcast %cst_5 : f32 to vector<64x128xf32>
    %7 = arith.maximumf %5, %6 : vector<64x128xf32>
    %c16 = arith.constant 16 : index
    %c0_6 = arith.constant 0 : index
    %8 = vector.load %arg2[%c16, %c0_6] : memref<272x128xf32, #tpu.memory_space<vmem>>, vector<128x128xf32>
    %c1 = arith.constant 1 : index
    %c0_7 = arith.constant 0 : index
    %9 = vector.load %arg3[%c1, %c0_7] : memref<3x128xf32, #tpu.memory_space<vmem>>, vector<1x128xf32>
    %cst_8 = arith.constant dense<0.000000e+00> : vector<64x128xf32>
    %10 = tpu.matmul %7, %8, %cst_8 {dimension_numbers = #tpu.dot_dimension_numbers<[1], [0], [0], [1], [0, 0, 1, 1], [], []>} : vector<64x128xf32>, vector<128x128xf32>, vector<64x128xf32> -> vector<64x128xf32>
    %11 = vector.broadcast %9 : vector<1x128xf32> to vector<64x128xf32>
    %12 = arith.addf %10, %11 : vector<64x128xf32>
    %cst_9 = arith.constant 0.000000e+00 : f32
    %13 = vector.broadcast %cst_9 : f32 to vector<64x128xf32>
    %14 = arith.maximumf %12, %13 : vector<64x128xf32>
    %c144 = arith.constant 144 : index
    %c0_10 = arith.constant 0 : index
    %15 = vector.load %arg2[%c144, %c0_10] : memref<272x128xf32, #tpu.memory_space<vmem>>, vector<128x128xf32>
    %c2 = arith.constant 2 : index
    %c0_11 = arith.constant 0 : index
    %16 = vector.load %arg3[%c2, %c0_11] : memref<3x128xf32, #tpu.memory_space<vmem>>, vector<1x128xf32>
    %cst_12 = arith.constant dense<0.000000e+00> : vector<64x128xf32>
    %17 = tpu.matmul %14, %15, %cst_12 {dimension_numbers = #tpu.dot_dimension_numbers<[1], [0], [0], [1], [0, 0, 1, 1], [], []>} : vector<64x128xf32>, vector<128x128xf32>, vector<64x128xf32> -> vector<64x128xf32>
    %18 = vector.broadcast %16 : vector<1x128xf32> to vector<64x128xf32>
    %19 = arith.addf %17, %18 : vector<64x128xf32>
    %c0_13 = arith.constant 0 : index
    %c0_14 = arith.constant 0 : index
    %20 = vector.load %arg4[%c0_13, %c0_14] : memref<64x128xf32, #tpu.memory_space<vmem>>, vector<64x128xf32>
    tpu.vector_store %arg4[%c0_13, %c0_14], %19 {strides = array<i32>} : memref<64x128xf32, #tpu.memory_space<vmem>>, vector<64x128xf32>,
    return
  }
  func.func @transform_0(%arg0: i32) -> (i32, i32) {
    %c0_i32 = arith.constant 0 : i32
    %c0_i32_0 = arith.constant 0 : i32
    return %arg0, %c0_i32 : i32, i32
  }
  func.func @transform_1(%arg0: i32) -> (i32, i32) {
    %c0_i32 = arith.constant 0 : i32
    %c0_i32_0 = arith.constant 0 : i32
    %c0_i32_1 = arith.constant 0 : i32
    return %c0_i32, %c0_i32_0 : i32, i32
  }
  func.func @transform_2(%arg0: i32) -> (i32, i32) {
    %c0_i32 = arith.constant 0 : i32
    %c0_i32_0 = arith.constant 0 : i32
    %c0_i32_1 = arith.constant 0 : i32
    return %c0_i32, %c0_i32_0 : i32, i32
  }
  func.func @transform_3(%arg0: i32) -> (i32, i32) {
    %c0_i32 = arith.constant 0 : i32
    %c0_i32_0 = arith.constant 0 : i32
    return %arg0, %c0_i32 : i32, i32
  }
}

</mosaic_0001>

<llo_original>
// kernel: tpu_custom_call.1
$region0: #{tpu_custom_call.1}
  #allocation0 [shape = 'u32[]', space=smem, size = 0x4, offset = 0x4, fixed_abs, tag = 'smem constant byte address 0x4 - core index']
  #allocation1 [shape = 'u32[144,128]{1,0:T(1,128)}', space=vmem, size = 0x12000, scoped, tag = 'internal scratch']
  %s0 = inlined_call_operand.vmem [shape: f32[256,16], index: 0, kind: input, shape index: {}]
  %s1 = inlined_call_operand.vmem [shape: f32[272,128], index: 1, kind: input, shape index: {}]
  %s2 = inlined_call_operand.vmem [shape: f32[3,128], index: 2, kind: input, shape index: {}]
  %s3 = inlined_call_operand.hbm [shape: f32[256,128], index: 3, kind: output, shape index: {}]
  %s4 = sld [smem:[#allocation0]]
  $region45: #{tpu_custom_call.1} parent=0
    _
  %s6 = ssub.s32 1, %s4
  %s7 = scalar_select 0, %s6, %s4
  $region1: #{tpu_custom_call.1} parent=0
    #allocation2 [shape = 'u8[65536]{0}', space=vmem, size = 0x10000, scoped, tag = 'output window, operand 0']
    #allocation3 [shape = 's32[2]{0}', space=sflag, size = 0x8, scoped, tag = 'scoped memory for tpu_custom_call.1']
    %8 = vsyncpa [#allocation3], 0
    %s9 = scalar_lea.sflag [#allocation3], 1
    %10 = vsyncpa %s9, 0
    loop: start=0, step=1, limit=6
    $region2: #{tpu_custom_call.1} parent=1 // loop_pre_header
      _
    $region3: #{tpu_custom_call.1} parent=1 // loop_header
      %s12 = sphi 0, %s16
      %p13 = scmp.ge.s32.totalorder %s12, 6
      %s22 = sphi 0, %s24
      %s25 = sphi 0, %s22
      %s26 = sphi 0, %s25
      %s42 = sphi 0, %s26
      %s46 = sphi 0, %s46
      %s48 = sphi 0, %s46
      %s49 = sphi 0, %s48
      %s63 = sphi 0, %s49
      %s67 = sphi 0, %s67
      %s69 = sphi 0, %s67
      %s70 = sphi 0, %s69
      %s84 = sphi 0, %s70
      %s90 = sphi 0, %s92
      %s93 = sphi 0, %s90
      %s94 = sphi 0, %s93
      %s110 = sphi 0, %s94
    $region4: #{tpu_custom_call.1} parent=1 // loop_header_branch
      %15 = sbr.rel (%p13) target = $region8
    $region5: #{tpu_custom_call.1} parent=1 // loop_body
      %s17 = ssub.s32 %s12, 1
      %s18 = ssub.s32 %s12, 2
      %s19 = sadd.s32 %s12, 1
      %s20 = ssub.s32 %s12, %s19
      %p21 = scmp.eq.s32.totalorder %s20, 0
      %s23 = sadd.s32 %s22, 1
      %s24 = scalar_select %p21, %s22, %s23
      %p27 = pneg %p21
      %p28 = scmp.eq.s32.totalorder %s12, 3
      %p29 = por %p27, %p28
      %p30 = scmp.ne.s32.totalorder %s22, %s25
      %p31 = scmp.eq.s32.totalorder %s12, 0
      %p32 = por %p30, %p31
      %p33 = scmp.ne.s32.totalorder %s22, %s25
      %p34 = scmp.eq.s32.totalorder %s17, 3
      %p35 = por %p33, %p34
      %p36 = scmp.ne.s32.totalorder %s25, %s26
      %p37 = scmp.eq.s32.totalorder %s17, 0
      %p38 = por %p36, %p37
      %p39 = scmp.ne.s32.totalorder %s25, %s26
      %p40 = scmp.eq.s32.totalorder %s18, 3
      %p41 = por %p39, %p40
      %p43 = scmp.ne.s32.totalorder %s26, %s42
      %p44 = scmp.eq.s32.totalorder %s18, 0
      %p45 = por %p43, %p44
      %s47 = sadd.s32 %s46, 1
      %p50 = scmp.eq.s32.totalorder %s12, 3
      %p51 = scmp.ne.s32.totalorder %s46, %s48
      %p52 = scmp.eq.s32.totalorder %s12, 0
      %p53 = por %p51, %p52
      %p54 = scmp.ne.s32.totalorder %s46, %s48
      %p55 = scmp.eq.s32.totalorder %s17, 3
      %p56 = por %p54, %p55
      %p57 = scmp.ne.s32.totalorder %s48, %s49
      %p58 = scmp.eq.s32.totalorder %s17, 0
      %p59 = por %p57, %p58
      %p60 = scmp.ne.s32.totalorder %s48, %s49
      %p61 = scmp.eq.s32.totalorder %s18, 3
      %p62 = por %p60, %p61
      %p64 = scmp.ne.s32.totalorder %s49, %s63
      %p65 = scmp.eq.s32.totalorder %s18, 0
      %p66 = por %p64, %p65
      %s68 = sadd.s32 %s67, 1
      %p71 = scmp.eq.s32.totalorder %s12, 3
      %p72 = scmp.ne.s32.totalorder %s67, %s69
      %p73 = scmp.eq.s32.totalorder %s12, 0
      %p74 = por %p72, %p73
      %p75 = scmp.ne.s32.totalorder %s67, %s69
      %p76 = scmp.eq.s32.totalorder %s17, 3
      %p77 = por %p75, %p76
      %p78 = scmp.ne.s32.totalorder %s69, %s70
      %p79 = scmp.eq.s32.totalorder %s17, 0
      %p80 = por %p78, %p79
      %p81 = scmp.ne.s32.totalorder %s69, %s70
      %p82 = scmp.eq.s32.totalorder %s18, 3
      %p83 = por %p81, %p82
      %p85 = scmp.ne.s32.totalorder %s70, %s84
      %p86 = scmp.eq.s32.totalorder %s18, 0
      %p87 = por %p85, %p86
      %s88 = ssub.s32 %s12, %s19
      %p89 = scmp.eq.s32.totalorder %s88, 0
      %s91 = sadd.s32 %s90, 1
      %s92 = scalar_select %p89, %s90, %s91
      %p95 = pneg %p89
      %p96 = scmp.eq.s32.totalorder %s12, 3
      %p97 = por %p95, %p96
      %p98 = scmp.ne.s32.totalorder %s90, %s93
      %p99 = scmp.eq.s32.totalorder %s12, 0
      %p100 = por %p98, %p99
      %p101 = scmp.ne.s32.totalorder %s90, %s93
      %p102 = scmp.eq.s32.totalorder %s17, 3
      %p103 = por %p101, %p102
      %p104 = scmp.ne.s32.totalorder %s93, %s94
      %p105 = scmp.eq.s32.totalorder %s17, 0
      %p106 = por %p104, %p105
      %p107 = scmp.ne.s32.totalorder %s93, %s94
      %p108 = scmp.eq.s32.totalorder %s18, 3
      %p109 = por %p107, %p108
      %p111 = scmp.ne.s32.totalorder %s94, %s110
      %p112 = scmp.eq.s32.totalorder %s18, 0
      %p113 = por %p111, %p112
      %p114 = scmp.le.s32.totalorder 1, %s12
      %p115 = scmp.lt.s32.totalorder %s12, 5
      %p116 = pnand %p114, %p115
      %p117 = pneg %p116
      // Predicated region
      $region9: #{tpu_custom_call.1} parent=5 // pred_check
        _
      $region10: #{tpu_custom_call.1} parent=5 // pred_check_branch
        %119 = sbr.rel (%p116) target = $region12
      $region11: #{tpu_custom_call.1} parent=5 // pred_region
        %s120 = ssub.s32 %s12, 1
        // Predicated region
        $region13: #{tpu_custom_call.1} parent=11 // pred_check
          %p121 = pneg %p59
        $region14: #{tpu_custom_call.1} parent=11 // pred_check_branch
          %123 = sbr.rel (%p121) target = $region16
        $region15: #{tpu_custom_call.1} parent=11 // pred_region
          _
        $region16: #{tpu_custom_call.1} parent=11 // pred_fallthru
          _
        // Predicated region
        $region17: #{tpu_custom_call.1} parent=11 // pred_check
          %p124 = pneg %p80
        $region18: #{tpu_custom_call.1} parent=11 // pred_check_branch
          %126 = sbr.rel (%p124) target = $region20
        $region19: #{tpu_custom_call.1} parent=11 // pred_region
          _
        $region20: #{tpu_custom_call.1} parent=11 // pred_fallthru
          _
      $region12: #{tpu_custom_call.1} parent=5 // pred_fallthru
        _
      %p127 = scmp.lt.s32.totalorder %s12, 4
      // Predicated region
      $region21: #{tpu_custom_call.1} parent=5 // pred_check
        %p128 = pneg %p127
      $region22: #{tpu_custom_call.1} parent=5 // pred_check_branch
        %130 = sbr.rel (%p128) target = $region24
      $region23: #{tpu_custom_call.1} parent=5 // pred_region
        // Predicated region
        $region25: #{tpu_custom_call.1} parent=23 // pred_check
          %p131 = pneg %p32
        $region26: #{tpu_custom_call.1} parent=23 // pred_check_branch
          %133 = sbr.rel (%p131) target = $region28
        $region27: #{tpu_custom_call.1} parent=23 // pred_region
          %s134 = smul.u32 8, %s12
          %p135 = scmp.lt.s32.totalorder %s134, 31
          %s136 = scalar_select %p135, %s134, 31
          %s137 = smul.addr %s136, 8
          %s138 = scalar_lea.vmem %s0, %s137
          %s139 = smul.u32 8, %s12
        $region28: #{tpu_custom_call.1} parent=23 // pred_fallthru
          _
      $region24: #{tpu_custom_call.1} parent=5 // pred_fallthru
        _
      %p140 = scmp.le.s32.totalorder 1, %s12
      %p141 = scmp.lt.s32.totalorder %s12, 5
      %p142 = pnand %p140, %p141
      %p143 = pneg %p142
      // Predicated region
      $region29: #{tpu_custom_call.1} parent=5 // pred_check
        _
      $region30: #{tpu_custom_call.1} parent=5 // pred_check_branch
        %145 = sbr.rel (%p142) target = $region32
      $region31: #{tpu_custom_call.1} parent=5 // pred_region
        %s146 = ssub.s32 %s12, 1
        %s147 = smul.u32 8, %s17
        %p148 = scmp.lt.s32.totalorder %s147, 31
        %s149 = scalar_select %p148, %s147, 31
        %s150 = smul.addr %s149, 8
        %s151 = scalar_lea.vmem %s0, %s150
        %p152 = pneg %p38
        %p153 = pneg %p35
        %p154 = pneg %p59
        %p155 = pneg %p56
        %p156 = pneg %p80
        %p157 = pneg %p77
        %p158 = pneg %p106
        %p159 = pneg %p103
        %s160 = sand.u32 %s93, 1
        %s161 = scalar_lea.sflag [#allocation3], %s160
        %s162 = sand.u32 %s93, 1
        %s163 = smul.addr %s162, 64
        %s164 = scalar_lea.vmem [#allocation2], %s163
        %s165 = smul.u32 8, %s17
        %p166 = scmp.lt.s32.totalorder %s165, 31
        %s167 = scalar_select %p166, %s165, 31
        %s168 = smul.addr %s167, 8
        %s169 = scalar_lea.vmem %s0, %s168
        %s170 = smul.u32 8, %s17
        %s171 = smul.u32 8, %s17
        %v172 = vld [vmem:[%s169] sm:$0xff]
        %v173 = vld [vmem:[%s169 + $0x8] sm:$0xff]
        %v174 = vld [vmem:[%s169 + $0x10] sm:$0xff]
        %v175 = vld [vmem:[%s169 + $0x18] sm:$0xff]
        %v176 = vld [vmem:[%s169 + $0x20] sm:$0xff]
        %v177 = vld [vmem:[%s169 + $0x28] sm:$0xff]
        %v178 = vld [vmem:[%s169 + $0x30] sm:$0xff]
        %v179 = vld [vmem:[%s169 + $0x38] sm:$0xff]
        %v180 = vld [vmem:[%s1] sm:$0xff]
        %v181 = vld [vmem:[%s1 + $0x8] sm:$0xff]
        %v182 = vld [vmem:[%s2] sm:$0x1]
        %v183 = vlaneseq
        %v184 = vshrl.u32 %v183, 7
        %v185 = vsub.s32 0, %v184
        %v186 = vrot.slane %v182, %v185
        %vm187 = vcmask 130048
        %v189 = vsel %vm187, %v172, 0
        %v192 = vsel %vm187, %v173, 0
        %v195 = vsel %vm187, %v174, 0
        %v198 = vsel %vm187, %v175, 0
        %v201 = vsel %vm187, %v176, 0
        %v204 = vsel %vm187, %v177, 0
        %v207 = vsel %vm187, %v178, 0
        %v210 = vsel %vm187, %v179, 0
        %212 = vmatprep.subr.mxu0 0.0
        %213 = vmatpush1.msra.mxu0 0.0
        %214 = vmatprep.subr.mxu0 0.0
        %215 = vmatpush1.msra.mxu0 0.0
        %216 = vmatprep.subr.mxu0 0.0
        %217 = vmatpush1.msra.mxu0 0.0
        %218 = vmatprep.subr.mxu0 0.0
        %219 = vmatpush1.msra.mxu0 0.0
        %220 = vmatprep.subr.mxu0 0.0
        %221 = vmatpush1.msra.mxu0 0.0
        %222 = vmatprep.subr.mxu0 0.0
        %223 = vmatpush1.msra.mxu0 0.0
        %224 = vmatprep.subr.mxu0 0.0
        %225 = vmatpush1.msra.mxu0 0.0
        %226 = vmatprep.subr.mxu0 0.0
        %227 = vmatpush1.msra.mxu0 0.0
        %228 = vmatprep.subr.mxu0 0.0
        %229 = vmatpush1.msra.mxu0 0.0
        %230 = vmatprep.subr.mxu0 0.0
        %231 = vmatpush1.msra.mxu0 0.0
        %232 = vmatprep.subr.mxu0 0.0
        %233 = vmatpush1.msra.mxu0 0.0
        %234 = vmatprep.subr.mxu0 0.0
        %235 = vmatpush1.msra.mxu0 0.0
        %236 = vmatprep.subr.mxu0 0.0
        %237 = vmatpush1.msra.mxu0 0.0
        %238 = vmatprep.subr.mxu0 0.0
        %239 = vmatpush1.msra.mxu0 0.0
        %240 = vmatprep.subr.mxu0 0.0
        %241 = vmatpush1.msra.mxu0 %v181
        %242 = vmatprep.subr.mxu0 0.0
        %243 = vmatpush1.msra.mxu0 %v180
        %244 = vmatprep.subr.mxu0 0.0
        %245 = vmatpush2.msra.mxu0 0.0
        %246 = vmatprep.subr.mxu0 0.0
        %247 = vmatpush2.msra.mxu0 0.0
        %248 = vmatprep.subr.mxu0 0.0
        %249 = vmatpush2.msra.mxu0 0.0
        %250 = vmatprep.subr.mxu0 0.0
        %251 = vmatpush2.msra.mxu0 0.0
        %252 = vmatprep.subr.mxu0 0.0
        %253 = vmatpush2.msra.mxu0 0.0
        %254 = vmatprep.subr.mxu0 0.0
        %255 = vmatpush2.msra.mxu0 0.0
        %256 = vmatprep.subr.mxu0 0.0
        %257 = vmatpush2.msra.mxu0 0.0
        %258 = vmatprep.subr.mxu0 0.0
        %259 = vmatpush2.msra.mxu0 0.0
        %260 = vmatprep.subr.mxu0 0.0
        %261 = vmatpush2.msra.mxu0 0.0
        %262 = vmatprep.subr.mxu0 0.0
        %263 = vmatpush2.msra.mxu0 0.0
        %264 = vmatprep.subr.mxu0 0.0
        %265 = vmatpush2.msra.mxu0 0.0
        %266 = vmatprep.subr.mxu0 0.0
        %267 = vmatpush2.msra.mxu0 0.0
        %268 = vmatprep.subr.mxu0 0.0
        %269 = vmatpush2.msra.mxu0 0.0
        %270 = vmatprep.subr.mxu0 0.0
        %271 = vmatpush2.msra.mxu0 0.0
        %272 = vmatprep.subr.mxu0 0.0
        %273 = vmatpush2.msra.mxu0 0.0
        %274 = vmatprep.subr.mxu0 0.0
        %275 = vmatpush2.msra.mxu0 0.0
        %276 = vmatprep.mubr.f32.mxu0 0.0
        %277 = vmatmul.mubr.f32.gmra.mxu0 %v189
        %v278 = vpop.f32.mrf.mxu0
        %v279 = vadd.f32 %v186, %v278
        %v280 = vpop.f32.mrf.mxu0
        %281 = vmatprep.mubr.f32.mxu0 0.0
        %282 = vmatmul.mubr.f32.gmra.mxu0 %v192
        %v283 = vpop.f32.mrf.mxu0
        %v284 = vadd.f32 %v186, %v283
        %v285 = vpop.f32.mrf.mxu0
        %286 = vmatprep.mubr.f32.mxu0 0.0
        %287 = vmatmul.mubr.f32.gmra.mxu0 %v195
        %v288 = vpop.f32.mrf.mxu0
        %v289 = vadd.f32 %v186, %v288
        %v290 = vpop.f32.mrf.mxu0
        %291 = vmatprep.mubr.f32.mxu0 0.0
        %292 = vmatmul.mubr.f32.gmra.mxu0 %v198
        %v293 = vpop.f32.mrf.mxu0
        %v294 = vadd.f32 %v186, %v293
        %v295 = vpop.f32.mrf.mxu0
        %296 = vmatprep.mubr.f32.mxu0 0.0
        %297 = vmatmul.mubr.f32.gmra.mxu0 %v201
        %v298 = vpop.f32.mrf.mxu0
        %v299 = vadd.f32 %v186, %v298
        %v300 = vpop.f32.mrf.mxu0
        %301 = vmatprep.mubr.f32.mxu0 0.0
        %302 = vmatmul.mubr.f32.gmra.mxu0 %v204
        %v303 = vpop.f32.mrf.mxu0
        %v304 = vadd.f32 %v186, %v303
        %v305 = vpop.f32.mrf.mxu0
        %306 = vmatprep.mubr.f32.mxu0 0.0
        %307 = vmatmul.mubr.f32.gmra.mxu0 %v207
        %v308 = vpop.f32.mrf.mxu0
        %v309 = vadd.f32 %v186, %v308
        %v310 = vpop.f32.mrf.mxu0
        %311 = vmatprep.mubr.f32.mxu0 0.0
        %312 = vmatmul.mubr.f32.gmra.mxu0 %v210
        %v313 = vpop.f32.mrf.mxu0
        %v314 = vadd.f32 %v186, %v313
        %v315 = vpop.f32.mrf.mxu0
        %316 = vdwg.mxu0
        %v317 = vmax.f32 %v279, 0.0
        %v318 = vmax.f32 %v284, 0.0
        %v319 = vmax.f32 %v289, 0.0
        %v320 = vmax.f32 %v294, 0.0
        %v321 = vmax.f32 %v299, 0.0
        %v322 = vmax.f32 %v304, 0.0
        %v323 = vmax.f32 %v309, 0.0
        %v324 = vmax.f32 %v314, 0.0
        %v325 = vld [vmem:[%s1 + $0x10] sm:$0xff]
        %v326 = vld [vmem:[%s1 + $0x18] sm:$0xff]
        %v327 = vld [vmem:[%s1 + $0x20] sm:$0xff]
        %v328 = vld [vmem:[%s1 + $0x28] sm:$0xff]
        %v329 = vld [vmem:[%s1 + $0x30] sm:$0xff]
        %v330 = vld [vmem:[%s1 + $0x38] sm:$0xff]
        %v331 = vld [vmem:[%s1 + $0x40] sm:$0xff]
        %v332 = vld [vmem:[%s1 + $0x48] sm:$0xff]
        %v333 = vld [vmem:[%s1 + $0x50] sm:$0xff]
        %v334 = vld [vmem:[%s1 + $0x58] sm:$0xff]
        %v335 = vld [vmem:[%s1 + $0x60] sm:$0xff]
        %v336 = vld [vmem:[%s1 + $0x68] sm:$0xff]
        %v337 = vld [vmem:[%s1 + $0x70] sm:$0xff]
        %v338 = vld [vmem:[%s1 + $0x78] sm:$0xff]
        %v339 = vld [vmem:[%s1 + $0x80] sm:$0xff]
        %v340 = vld [vmem:[%s1 + $0x88] sm:$0xff]
        %v341 = vld [vmem:[%s2 + $0x1] sm:$0x1]
        %v342 = vlaneseq
        %v343 = vshrl.u32 %v342, 7
        %v344 = vsub.s32 0, %v343
        %v345 = vrot.slane %v341, %v344
        %346 = vmatprep.subr.mxu0 0.0
        %347 = vmatpush1.msra.mxu0 %v340
        %348 = vmatprep.subr.mxu0 0.0
        %349 = vmatpush1.msra.mxu0 %v339
        %350 = vmatprep.subr.mxu0 0.0
        %351 = vmatpush1.msra.mxu0 %v338
        %352 = vmatprep.subr.mxu0 0.0
        %353 = vmatpush1.msra.mxu0 %v337
        %354 = vmatprep.subr.mxu0 0.0
        %355 = vmatpush1.msra.mxu0 %v336
        %356 = vmatprep.subr.mxu0 0.0
        %357 = vmatpush1.msra.mxu0 %v335
        %358 = vmatprep.subr.mxu0 0.0
        %359 = vmatpush1.msra.mxu0 %v334
        %360 = vmatprep.subr.mxu0 0.0
        %361 = vmatpush1.msra.mxu0 %v333
        %362 = vmatprep.subr.mxu0 0.0
        %363 = vmatpush1.msra.mxu0 %v332
        %364 = vmatprep.subr.mxu0 0.0
        %365 = vmatpush1.msra.mxu0 %v331
        %366 = vmatprep.subr.mxu0 0.0
        %367 = vmatpush1.msra.mxu0 %v330
        %368 = vmatprep.subr.mxu0 0.0
        %369 = vmatpush1.msra.mxu0 %v329
        %370 = vmatprep.subr.mxu0 0.0
        %371 = vmatpush1.msra.mxu0 %v328
        %372 = vmatprep.subr.mxu0 0.0
        %373 = vmatpush1.msra.mxu0 %v327
        %374 = vmatprep.subr.mxu0 0.0
        %375 = vmatpush1.msra.mxu0 %v326
        %376 = vmatprep.subr.mxu0 0.0
        %377 = vmatpush1.msra.mxu0 %v325
        %378 = vmatprep.subr.mxu0 0.0
        %379 = vmatpush2.msra.mxu0 0.0
        %380 = vmatprep.subr.mxu0 0.0
        %381 = vmatpush2.msra.mxu0 0.0
        %382 = vmatprep.subr.mxu0 0.0
        %383 = vmatpush2.msra.mxu0 0.0
        %384 = vmatprep.subr.mxu0 0.0
        %385 = vmatpush2.msra.mxu0 0.0
        %386 = vmatprep.subr.mxu0 0.0
        %387 = vmatpush2.msra.mxu0 0.0
        %388 = vmatprep.subr.mxu0 0.0
        %389 = vmatpush2.msra.mxu0 0.0
        %390 = vmatprep.subr.mxu0 0.0
        %391 = vmatpush2.msra.mxu0 0.0
        %392 = vmatprep.subr.mxu0 0.0
        %393 = vmatpush2.msra.mxu0 0.0
        %394 = vmatprep.subr.mxu0 0.0
        %395 = vmatpush2.msra.mxu0 0.0
        %396 = vmatprep.subr.mxu0 0.0
        %397 = vmatpush2.msra.mxu0 0.0
        %398 = vmatprep.subr.mxu0 0.0
        %399 = vmatpush2.msra.mxu0 0.0
        %400 = vmatprep.subr.mxu0 0.0
        %401 = vmatpush2.msra.mxu0 0.0
        %402 = vmatprep.subr.mxu0 0.0
        %403 = vmatpush2.msra.mxu0 0.0
        %404 = vmatprep.subr.mxu0 0.0
        %405 = vmatpush2.msra.mxu0 0.0
        %406 = vmatprep.subr.mxu0 0.0
        %407 = vmatpush2.msra.mxu0 0.0
        %408 = vmatprep.subr.mxu0 0.0
        %409 = vmatpush2.msra.mxu0 0.0
        %410 = vmatprep.mubr.f32.mxu0 0.0
        %411 = vmatmul.mubr.f32.gmra.mxu0 %v317
        %v412 = vpop.f32.mrf.mxu0
        %v413 = vadd.f32 %v345, %v412
        %v414 = vpop.f32.mrf.mxu0
        %415 = vmatprep.mubr.f32.mxu0 0.0
        %416 = vmatmul.mubr.f32.gmra.mxu0 %v318
        %v417 = vpop.f32.mrf.mxu0
        %v418 = vadd.f32 %v345, %v417
        %v419 = vpop.f32.mrf.mxu0
        %420 = vmatprep.mubr.f32.mxu0 0.0
        %421 = vmatmul.mubr.f32.gmra.mxu0 %v319
        %v422 = vpop.f32.mrf.mxu0
        %v423 = vadd.f32 %v345, %v422
        %v424 = vpop.f32.mrf.mxu0
        %425 = vmatprep.mubr.f32.mxu0 0.0
        %426 = vmatmul.mubr.f32.gmra.mxu0 %v320
        %v427 = vpop.f32.mrf.mxu0
        %v428 = vadd.f32 %v345, %v427
        %v429 = vpop.f32.mrf.mxu0
        %430 = vmatprep.mubr.f32.mxu0 0.0
        %431 = vmatmul.mubr.f32.gmra.mxu0 %v321
        %v432 = vpop.f32.mrf.mxu0
        %v433 = vadd.f32 %v345, %v432
        %v434 = vpop.f32.mrf.mxu0
        %435 = vmatprep.mubr.f32.mxu0 0.0
        %436 = vmatmul.mubr.f32.gmra.mxu0 %v322
        %v437 = vpop.f32.mrf.mxu0
        %v438 = vadd.f32 %v345, %v437
        %v439 = vpop.f32.mrf.mxu0
        %440 = vmatprep.mubr.f32.mxu0 0.0
        %441 = vmatmul.mubr.f32.gmra.mxu0 %v323
        %v442 = vpop.f32.mrf.mxu0
        %v443 = vadd.f32 %v345, %v442
        %v444 = vpop.f32.mrf.mxu0
        %445 = vmatprep.mubr.f32.mxu0 0.0
        %446 = vmatmul.mubr.f32.gmra.mxu0 %v324
        %v447 = vpop.f32.mrf.mxu0
        %v448 = vadd.f32 %v345, %v447
        %v449 = vpop.f32.mrf.mxu0
        %450 = vdwg.mxu0
        %v451 = vmax.f32 %v413, 0.0
        %v452 = vmax.f32 %v418, 0.0
        %v453 = vmax.f32 %v423, 0.0
        %v454 = vmax.f32 %v428, 0.0
        %v455 = vmax.f32 %v433, 0.0
        %v456 = vmax.f32 %v438, 0.0
        %v457 = vmax.f32 %v443, 0.0
        %v458 = vmax.f32 %v448, 0.0
        %v459 = vld [vmem:[%s1 + $0x90] sm:$0xff]
        %v460 = vld [vmem:[%s1 + $0x98] sm:$0xff]
        %v461 = vld [vmem:[%s1 + $0xa0] sm:$0xff]
        %v462 = vld [vmem:[%s1 + $0xa8] sm:$0xff]
        %v463 = vld [vmem:[%s1 + $0xb0] sm:$0xff]
        %v464 = vld [vmem:[%s1 + $0xb8] sm:$0xff]
        %v465 = vld [vmem:[%s1 + $0xc0] sm:$0xff]
        %v466 = vld [vmem:[%s1 + $0xc8] sm:$0xff]
        %v467 = vld [vmem:[%s1 + $0xd0] sm:$0xff]
        %v468 = vld [vmem:[%s1 + $0xd8] sm:$0xff]
        %v469 = vld [vmem:[%s1 + $0xe0] sm:$0xff]
        %v470 = vld [vmem:[%s1 + $0xe8] sm:$0xff]
        %v471 = vld [vmem:[%s1 + $0xf0] sm:$0xff]
        %v472 = vld [vmem:[%s1 + $0xf8] sm:$0xff]
        %v473 = vld [vmem:[%s1 + $0x100] sm:$0xff]
        %v474 = vld [vmem:[%s1 + $0x108] sm:$0xff]
        %v475 = vld [vmem:[%s2 + $0x2] sm:$0x1]
        %v476 = vlaneseq
        %v477 = vshrl.u32 %v476, 7
        %v478 = vsub.s32 0, %v477
        %v479 = vrot.slane %v475, %v478
        %480 = vmatprep.subr.mxu0 0.0
        %481 = vmatpush1.msra.mxu0 %v474
        %482 = vmatprep.subr.mxu0 0.0
        %483 = vmatpush1.msra.mxu0 %v473
        %484 = vmatprep.subr.mxu0 0.0
        %485 = vmatpush1.msra.mxu0 %v472
        %486 = vmatprep.subr.mxu0 0.0
        %487 = vmatpush1.msra.mxu0 %v471
        %488 = vmatprep.subr.mxu0 0.0
        %489 = vmatpush1.msra.mxu0 %v470
        %490 = vmatprep.subr.mxu0 0.0
        %491 = vmatpush1.msra.mxu0 %v469
        %492 = vmatprep.subr.mxu0 0.0
        %493 = vmatpush1.msra.mxu0 %v468
        %494 = vmatprep.subr.mxu0 0.0
        %495 = vmatpush1.msra.mxu0 %v467
        %496 = vmatprep.subr.mxu0 0.0
        %497 = vmatpush1.msra.mxu0 %v466
        %498 = vmatprep.subr.mxu0 0.0
        %499 = vmatpush1.msra.mxu0 %v465
        %500 = vmatprep.subr.mxu0 0.0
        %501 = vmatpush1.msra.mxu0 %v464
        %502 = vmatprep.subr.mxu0 0.0
        %503 = vmatpush1.msra.mxu0 %v463
        %504 = vmatprep.subr.mxu0 0.0
        %505 = vmatpush1.msra.mxu0 %v462
        %506 = vmatprep.subr.mxu0 0.0
        %507 = vmatpush1.msra.mxu0 %v461
        %508 = vmatprep.subr.mxu0 0.0
        %509 = vmatpush1.msra.mxu0 %v460
        %510 = vmatprep.subr.mxu0 0.0
        %511 = vmatpush1.msra.mxu0 %v459
        %512 = vmatprep.subr.mxu0 0.0
        %513 = vmatpush2.msra.mxu0 0.0
        %514 = vmatprep.subr.mxu0 0.0
        %515 = vmatpush2.msra.mxu0 0.0
        %516 = vmatprep.subr.mxu0 0.0
        %517 = vmatpush2.msra.mxu0 0.0
        %518 = vmatprep.subr.mxu0 0.0
        %519 = vmatpush2.msra.mxu0 0.0
        %520 = vmatprep.subr.mxu0 0.0
        %521 = vmatpush2.msra.mxu0 0.0
        %522 = vmatprep.subr.mxu0 0.0
        %523 = vmatpush2.msra.mxu0 0.0
        %524 = vmatprep.subr.mxu0 0.0
        %525 = vmatpush2.msra.mxu0 0.0
        %526 = vmatprep.subr.mxu0 0.0
        %527 = vmatpush2.msra.mxu0 0.0
        %528 = vmatprep.subr.mxu0 0.0
        %529 = vmatpush2.msra.mxu0 0.0
        %530 = vmatprep.subr.mxu0 0.0
        %531 = vmatpush2.msra.mxu0 0.0
        %532 = vmatprep.subr.mxu0 0.0
        %533 = vmatpush2.msra.mxu0 0.0
        %534 = vmatprep.subr.mxu0 0.0
        %535 = vmatpush2.msra.mxu0 0.0
        %536 = vmatprep.subr.mxu0 0.0
        %537 = vmatpush2.msra.mxu0 0.0
        %538 = vmatprep.subr.mxu0 0.0
        %539 = vmatpush2.msra.mxu0 0.0
        %540 = vmatprep.subr.mxu0 0.0
        %541 = vmatpush2.msra.mxu0 0.0
        %542 = vmatprep.subr.mxu0 0.0
        %543 = vmatpush2.msra.mxu0 0.0
        %544 = vmatprep.mubr.f32.mxu0 0.0
        %545 = vmatmul.mubr.f32.gmra.mxu0 %v451
        %v546 = vpop.f32.mrf.mxu0
        %v547 = vadd.f32 %v479, %v546
        %v548 = vpop.f32.mrf.mxu0
        %549 = vmatprep.mubr.f32.mxu0 0.0
        %550 = vmatmul.mubr.f32.gmra.mxu0 %v452
        %v551 = vpop.f32.mrf.mxu0
        %v552 = vadd.f32 %v479, %v551
        %v553 = vpop.f32.mrf.mxu0
        %554 = vmatprep.mubr.f32.mxu0 0.0
        %555 = vmatmul.mubr.f32.gmra.mxu0 %v453
        %v556 = vpop.f32.mrf.mxu0
        %v557 = vadd.f32 %v479, %v556
        %v558 = vpop.f32.mrf.mxu0
        %559 = vmatprep.mubr.f32.mxu0 0.0
        %560 = vmatmul.mubr.f32.gmra.mxu0 %v454
        %v561 = vpop.f32.mrf.mxu0
        %v562 = vadd.f32 %v479, %v561
        %v563 = vpop.f32.mrf.mxu0
        %564 = vmatprep.mubr.f32.mxu0 0.0
        %565 = vmatmul.mubr.f32.gmra.mxu0 %v455
        %v566 = vpop.f32.mrf.mxu0
        %v567 = vadd.f32 %v479, %v566
        %v568 = vpop.f32.mrf.mxu0
        %569 = vmatprep.mubr.f32.mxu0 0.0
        %570 = vmatmul.mubr.f32.gmra.mxu0 %v456
        %v571 = vpop.f32.mrf.mxu0
        %v572 = vadd.f32 %v479, %v571
        %v573 = vpop.f32.mrf.mxu0
        %574 = vmatprep.mubr.f32.mxu0 0.0
        %575 = vmatmul.mubr.f32.gmra.mxu0 %v457
        %v576 = vpop.f32.mrf.mxu0
        %v577 = vadd.f32 %v479, %v576
        %v578 = vpop.f32.mrf.mxu0
        %579 = vmatprep.mubr.f32.mxu0 0.0
        %580 = vmatmul.mubr.f32.gmra.mxu0 %v458
        %v581 = vpop.f32.mrf.mxu0
        %v582 = vadd.f32 %v479, %v581
        %v583 = vpop.f32.mrf.mxu0
        %584 = vdwg.mxu0
        %585 = vst [vmem:[%s164] sm:$0xff] %v547
        %586 = vst [vmem:[%s164 + $0x8] sm:$0xff] %v552
        %587 = vst [vmem:[%s164 + $0x10] sm:$0xff] %v557
        %588 = vst [vmem:[%s164 + $0x18] sm:$0xff] %v562
        %589 = vst [vmem:[%s164 + $0x20] sm:$0xff] %v567
        %590 = vst [vmem:[%s164 + $0x28] sm:$0xff] %v572
        %591 = vst [vmem:[%s164 + $0x30] sm:$0xff] %v577
        %592 = vst [vmem:[%s164 + $0x38] sm:$0xff] %v582
        %s593 = sand.u32 %s93, 1
        %s594 = scalar_lea.sflag [#allocation3], %s593
        %s595 = sand.u32 %s93, 1
        %s596 = smul.addr %s595, 64
        %s597 = scalar_lea.vmem [#allocation2], %s596
        // Predicated region
        $region33: #{tpu_custom_call.1} parent=31 // pred_check
          %p598 = pneg %p103
        $region34: #{tpu_custom_call.1} parent=31 // pred_check_branch
          %600 = sbr.rel (%p598) target = $region36
        $region35: #{tpu_custom_call.1} parent=31 // pred_region
          %s601 = smul.u32 8, %s17
          %s603 = ssub.s32 1024, 1024
          %604 = vsyncadd %s594, %s603
          %s605 = smul.addr %s601, 128
          %s606 = scalar_lea.hbm %s3, %s605
          %s607 = sshll.u32 %s597, 4
          %s608 = int_to_ptr.vmem [resolvable:$true] %s607
          %613 = dma.vmem_to_hbm [thread:$0]  %s608, 1024, %s606, %s594, 128, 128, 8
        $region36: #{tpu_custom_call.1} parent=31 // pred_fallthru
          _
      $region32: #{tpu_custom_call.1} parent=5 // pred_fallthru
        _
      %p614 = scmp.le.s32.totalorder 2, %s12
      // Predicated region
      $region37: #{tpu_custom_call.1} parent=5 // pred_check
        %p615 = pneg %p614
      $region38: #{tpu_custom_call.1} parent=5 // pred_check_branch
        %617 = sbr.rel (%p615) target = $region40
      $region39: #{tpu_custom_call.1} parent=5 // pred_region
        %s618 = ssub.s32 %s12, 2
        // Predicated region
        $region41: #{tpu_custom_call.1} parent=39 // pred_check
          %p619 = pneg %p109
        $region42: #{tpu_custom_call.1} parent=39 // pred_check_branch
          %621 = sbr.rel (%p619) target = $region44
        $region43: #{tpu_custom_call.1} parent=39 // pred_region
          %s622 = sand.u32 %s94, 1
          %s623 = scalar_lea.sflag [#allocation3], %s622
          %s624 = sand.u32 %s94, 1
          %s625 = smul.addr %s624, 64
          %s626 = scalar_lea.vmem [#allocation2], %s625
          %627 = dma.done %s623, 1024
        $region44: #{tpu_custom_call.1} parent=39 // pred_fallthru
          _
      $region40: #{tpu_custom_call.1} parent=5 // pred_fallthru
        _
    $region6: #{tpu_custom_call.1} parent=1 // loop_footer
      %s16 = sadd.s32 1, %s12
    $region7: #{tpu_custom_call.1} parent=1 // loop_footer_branch
      %11 = sbr.rel target = $region3
    $region8: #{tpu_custom_call.1} parent=1 // loop_exit
      _
    %628 = vsyncpa [#allocation3], 1
    %s629 = scalar_lea.sflag [#allocation3], 1
    %630 = vsyncpa %s629, 1

</llo_original>
